<compile_context>
chip_gen: v6e
topology: v6e:2x2x1
jax: 0.10.0
libtpu: 0.0.40
codegen_flags: <defaults>
</compile_context>

<pallas_src>
import jax
import jax.numpy as jnp
import numpy as np
from jax.experimental import pallas as pl
from jax.experimental.pallas import tpu as pltpu

_LANE = 128
_SUBLANE = 8
_TILE_BYTES_CAP = 4 * 1024 * 1024      # max bytes of one input block
_WORKING_SET_BYTES = 24 * 1024 * 1024  # all double-buffered input blocks together
_VMEM_LIMIT = 48 * 1024 * 1024         # scoped VMEM (<= v7x's 64 MiB physical)


# --------------------------------------------------------------------------- utils
def _cdiv(a, b):
    return -(-a // b)


def _round_up(a, m):
    return _cdiv(a, m) * m


def _round_down(a, m):
    return (a // m) * m


def _softplus(x):
    # numerically stable; inf/NaN from masked garbage rows is select-ed away.
    return jnp.maximum(x, 0.0) + jnp.log1p(jnp.exp(-jnp.abs(x)))


def _slab_view(x):
    """Lane-major 2-D view of `x`, zero-copy whenever possible.

    Returns (slab_2d, n_valid).  Elements with flat index >= n_valid (wrapper
    pad of tiny/awkward tensors, or Pallas ragged-block rows) are masked
    in-kernel, so no neutral-value padding of the data is required.
    """
    n = int(np.prod(x.shape)) if x.ndim else 1
    n = max(n, 1)
    # 1) flat (n/128, 128) view -- free bitcast, full lane utilisation.
    if n % _LANE == 0 and (n // _LANE) >= _SUBLANE:
        return jnp.reshape(x, (n // _LANE, _LANE)), n
    # 2) (prod(leading), last_dim) view -- still a free bitcast.
    if x.ndim >= 2:
        lead = int(np.prod(x.shape[:-1]))
        last = int(x.shape[-1])
        if (lead >= _SUBLANE and last >= _SUBLANE and
                _SUBLANE * _round_up(last, _LANE) * x.dtype.itemsize
                <= _TILE_BYTES_CAP):
            return jnp.reshape(x, (lead, last)), n
    # 3) fallback (tiny / awkward shapes only): pad flat to a (8k, 128) slab.
    flat = jnp.reshape(x, (-1,))
    padded = _round_up(max(int(flat.shape[0]), 1), _SUBLANE * _LANE)
    if padded > flat.shape[0]:
        flat = jnp.pad(flat, (0, padded - flat.shape[0]))
    return jnp.reshape(flat, (padded // _LANE, _LANE)), n


# --------------------------------------------------------------------------- terms
class _Term:
    """One additive loss term: softplus(sign*x).mean() or |a-b|.mean()."""

    def __init__(self, kind, slabs, n, sign=1.0):
        self.kind = kind            # "softplus" | "l1"
        self.slabs = slabs          # 1 slab (softplus) or 2 slabs (l1)
        self.n = int(n)             # true element count
        self.weight = 1.0 / self.n  # applied once, at finalize
        self.sign = sign
        self.rows = int(slabs[0].shape[0])
        self.cols = int(slabs[0].shape[1])
        self.tile_rows = 0
        self.ntiles = 0


def _softplus_term(x, sign):
    slab, n = _slab_view(x)
    return _Term("softplus", [slab], n, sign=sign)


def _l1_term(a, b):
    assert a.shape == b.shape, "L1Loss expects matching shapes"
    sa, n = _slab_view(a)
    sb, _ = _slab_view(b)
    return _Term("l1", [sa, sb], n)


def _plan(terms):
    """Pick per-term tile_rows so double-buffered blocks fit VMEM; return grid size."""
    n_slabs = sum(len(t.slabs) for t in terms)
    budget = max(_SUBLANE * _LANE * 4,
                 min(_TILE_BYTES_CAP, _WORKING_SET_BYTES // (2 * n_slabs)))
    for t in terms:
        row_bytes = _round_up(t.cols, _LANE) * t.slabs[0].dtype.itemsize
        tr = max(_SUBLANE, _round_down(budget // row_bytes, _SUBLANE))
        t.tile_rows = min(tr, _round_down(t.rows, _SUBLANE))   # rows >= 8 by construction
        t.ntiles = _cdiv(t.rows, t.tile_rows)
    return max(t.ntiles for t in terms)


# --------------------------------------------------------------------------- kernel
def _make_kernel(terms, groups, grid_steps):
    n_in = sum(len(t.slabs) for t in terms)
    n_out = len(groups)

    def kernel(*refs):
        in_refs = refs[:n_in]
        out_refs = refs[n_in:n_in + n_out]
        acc_refs = refs[n_in + n_out:]
        step = pl.program_id(0)

        @pl.when(step == 0)
        def _init():
            for acc in acc_refs:
                acc[...] = jnp.zeros_like(acc)

        pos = 0
        for t, acc in zip(terms, acc_refs):
            slabs = in_refs[pos:pos + len(t.slabs)]
            pos += len(t.slabs)

            if t.kind == "softplus":
                xf = slabs[0][...].astype(jnp.float32)
                val = _softplus(-xf if t.sign < 0 else xf)
            else:  # l1
                val = jnp.abs(slabs[0][...].astype(jnp.float32)
                              - slabs[1][...].astype(jnp.float32))

            # Mask padding: Pallas ragged rows of the last block, grid steps past
            # this term's tiles, and any wrapper pad of tiny inputs.
            full_rows, rem = divmod(t.n, t.cols)
            exact = (rem == 0 and full_rows == t.rows
                     and t.ntiles * t.tile_rows == t.rows
                     and t.ntiles == grid_steps)
            if not exact:
                rr = step * t.tile_rows + jax.lax.broadcasted_iota(
                    jnp.int32, (t.tile_rows, 1), 0)
                if rem == 0:
                    mask = rr < full_rows
                else:
                    cc = jax.lax.broadcasted_iota(
                        jnp.int32, (t.tile_rows, t.cols), 1)
                    mask = (rr < full_rows) | ((rr == full_rows) & (cc < rem))
                val = jnp.where(mask, val, 0.0)

            # VALU-only row-group accumulate into a (8, cols) VMEM vector acc.
            acc[...] += val.reshape(
                t.tile_rows // _SUBLANE, _SUBLANE, t.cols).sum(axis=0)

        @pl.when(step == grid_steps - 1)
        def _finalize():
            totals = [jnp.sum(acc_refs[k][...]) * jnp.float32(terms[k].weight)
                      for k in range(len(terms))]
            for idxs, o_ref in zip(groups, out_refs):
                v = totals[idxs[0]]
                for k in idxs[1:]:
                    v = v + totals[k]
                o_ref[...] = jnp.full(o_ref.shape, v, jnp.float32)

    return kernel


def _fused_reduce(terms, groups):
    """Stream every term through one pallas_call; return one scalar per group."""
    grid_steps = _plan(terms)

    inputs, in_specs = [], []
    for t in terms:
        if t.ntiles >= grid_steps:
            imap = lambda i: (i, 0)
        else:  # slab exhausted early: pin to its last block (no extra DMA)
            imap = lambda i, _last=t.ntiles - 1: (jnp.minimum(i, _last), 0)
        spec = pl.BlockSpec((t.tile_rows, t.cols), imap)
        for s in t.slabs:
            inputs.append(s)
            in_specs.append(spec)

    out_shape = tuple(jax.ShapeDtypeStruct((_SUBLANE, _LANE), jnp.float32)
                      for _ in groups)
    out_specs = tuple(pl.BlockSpec((_SUBLANE, _LANE), lambda i: (0, 0))
                      for _ in groups)
    scratch = [pltpu.VMEM((_SUBLANE, t.cols), jnp.float32) for t in terms]

    bytes_in = sum(int(np.prod(s.shape)) * s.dtype.itemsize
                   for t in terms for s in t.slabs)
    transcendentals = sum(2 * t.n for t in terms if t.kind == "softplus")
    flops = sum((8 if t.kind == "softplus" else 4) * t.n for t in terms)

    outs = pl.pallas_call(
        _make_kernel(terms, groups, grid_steps),
        out_shape=out_shape,
        grid=(grid_steps,),
        in_specs=in_specs,
        out_specs=out_specs,
        scratch_shapes=scratch,
        compiler_params=pltpu.CompilerParams(
            dimension_semantics=("arbitrary",),
            vmem_limit_bytes=_VMEM_LIMIT),
        cost_estimate=pl.CostEstimate(
            flops=int(flops),
            transcendentals=int(transcendentals),
            bytes_accessed=int(bytes_in + len(groups) * _SUBLANE * _LANE * 4)),
    )(*inputs)
    if not isinstance(outs, (tuple, list)):
        outs = (outs,)
    return [o[0, 0] for o in outs]


# --------------------------------------------------------------------------- public API
def stylegan_loss(fake, real=None, feature_fake=None, feature_real=None):
    """StyleGanLoss.forward.

    real given    -> scalar: softplus(-real).mean() + softplus(fake).mean()
    real is None  -> (softplus(-fake).mean(), feature-match L1 loss of shape (1,))
    """
    if real is not None:
        (d,) = _fused_reduce(
            [_softplus_term(real, sign=-1.0), _softplus_term(fake, sign=+1.0)],
            groups=[[0, 1]])
        return d

    terms = [_softplus_term(fake, sign=-1.0)]
    pairs = list(zip(feature_fake or [], feature_real or []))
    if not pairs:
        (g,) = _fused_reduce(terms, groups=[[0]])
        return g, jnp.zeros((1,), jnp.float32)
    for lhs, rhs in pairs:
        terms.append(_l1_term(lhs, rhs))
    g, fm = _fused_reduce(terms, groups=[[0], list(range(1, len(terms)))])
    return g, fm.reshape(1)


# --------------------------------------------------------------------------- reference
def _reference(fake, real=None, feature_fake=None, feature_real=None):
    sp = jax.nn.softplus
    if real is not None:
        return jnp.mean(sp(-real)) + jnp.mean(sp(fake))
    fm = jnp.zeros((1,), jnp.float32)
    for l, r in zip(feature_fake, feature_real):
        fm = fm + jnp.mean(jnp.abs(l - r))
    return jnp.mean(sp(-fake)), fm


if __name__ == "__main__":
    key = jax.random.PRNGKey(0)
    keys = jax.random.split(key, 16)

    # ---- small shapes matching the PyTorch usage (B=2, C=4/8/16, spatial 16/8/4)
    fake = jax.random.normal(keys[0], (2, 1, 16, 16), jnp.float32)
    real = jax.random.normal(keys[1], (2, 1, 16, 16), jnp.float32)
    feature_fake = [
        jax.random.normal(keys[2], (2, 4, 16, 16), jnp.float32),
        jax.random.normal(keys[3], (2, 8, 8, 8), jnp.float32),
        jax.random.normal(keys[4], (2, 16, 4, 4), jnp.float32),
    ]
    feature_real = [
        jax.random.normal(keys[5], (2, 4, 16, 16), jnp.float32),
        jax.random.normal(keys[6], (2, 8, 8, 8), jnp.float32),
        jax.random.normal(keys[7], (2, 16, 4, 4), jnp.float32),
    ]

    # Discriminator-style call: fake + real -> scalar loss.
    d_loss = jax.block_until_ready(stylegan_loss(fake, real=real))
    np.testing.assert_allclose(np.asarray(d_loss),
                               np.asarray(_reference(fake, real=real)),
                               rtol=1e-5, atol=1e-5)

    # Generator-style call: fake + feature matching -> (scalar, (1,)).
    g_loss, fm_loss = stylegan_loss(fake, feature_fake=feature_fake,
                                    feature_real=feature_real)
    jax.block_until_ready((g_loss, fm_loss))
    g_ref, fm_ref = _reference(fake, feature_fake=feature_fake,
                               feature_real=feature_real)
    np.testing.assert_allclose(np.asarray(g_loss), np.asarray(g_ref),
                               rtol=1e-5, atol=1e-5)
    np.testing.assert_allclose(np.asarray(fm_loss), np.asarray(fm_ref),
                               rtol=1e-5, atol=1e-5)
    assert fm_loss.shape == (1,)

    # ---- multi-tile grid with a ragged last tile (flat 128-divisible view).
    big_fake = jax.random.normal(keys[8], (3, 37, 128, 100), jnp.float32)
    big_real = jax.random.normal(keys[9], (3, 37, 128, 100), jnp.float32)
    big_d = jax.block_until_ready(stylegan_loss(big_fake, real=big_real))
    np.testing.assert_allclose(np.asarray(big_d),
                               np.asarray(_reference(big_fake, real=big_real)),
                               rtol=1e-4, atol=1e-4)

    # ---- odd shapes: (lead, last)=(77,13) view and the 1-D fallback-pad path.
    odd_fake = jax.random.normal(keys[10], (1000,), jnp.float32)
    odd_real = jax.random.normal(keys[11], (7, 11, 13), jnp.float32)
    odd_d = jax.block_until_ready(stylegan_loss(odd_fake, real=odd_real))
    np.testing.assert_allclose(np.asarray(odd_d),
                               np.asarray(_reference(odd_fake, real=odd_real)),
                               rtol=1e-5, atol=1e-5)

    # ---- generator mode with mismatched tile counts across pairs (clamped maps).
    big_ff = [jax.random.normal(keys[12], (2, 64, 128, 128), jnp.float32),
              jax.random.normal(keys[13], (2, 8, 100, 36), jnp.float32)]
    big_fr = [x * 0.5 for x in big_ff]
    big_g, big_fm = stylegan_loss(big_fake, feature_fake=big_ff, feature_real=big_fr)
    jax.block_until_ready((big_g, big_fm))
    big_g_ref, big_fm_ref = _reference(big_fake, feature_fake=big_ff,
                                       feature_real=big_fr)
    np.testing.assert_allclose(np.asarray(big_g), np.asarray(big_g_ref),
                               rtol=1e-4, atol=1e-4)
    np.testing.assert_allclose(np.asarray(big_fm), np.asarray(big_fm_ref),
                               rtol=1e-4, atol=1e-4)

    print("KERNEL_OK")
</pallas_src>

<mosaic_0001>
module attributes {stable_mosaic.version = 11 : i64} {
  func.func @kernel(%arg0: i32, %arg1: memref<32x16xf32, #tpu.memory_space<vmem>>, %arg2: memref<32x16xf32, #tpu.memory_space<vmem>>, %arg3: memref<8x128xf32, #tpu.memory_space<vmem>>, %arg4: memref<8x16xf32, #tpu.memory_space<vmem>>, %arg5: memref<8x16xf32, #tpu.memory_space<vmem>>) attributes {dimension_semantics = [#tpu.dimension_semantics<arbitrary>], iteration_bounds = array<i64: 1>, scalar_prefetch = 0 : i64, scratch_operands = 2 : i64, tpu.core_type = #tpu.core_type<tc>, window_params = [{transform_indices = @transform_0, window_bounds = array<i64: 32, 16>}, {transform_indices = @transform_1, window_bounds = array<i64: 32, 16>}, {pipeline_mode = #tpu.pipeline_mode<synchronous>, transform_indices = @transform_2, window_bounds = array<i64: 8, 128>}]} {
    %c0_i32 = arith.constant 0 : i32
    %0 = arith.cmpi eq, %arg0, %c0_i32 : i32
    %1 = arith.extui %0 : i1 to i32
    %c0_i32_0 = arith.constant 0 : i32
    %2 = arith.cmpi ne, %1, %c0_i32_0 : i32
    scf.if %2 {
      %cst_20 = arith.constant 0.000000e+00 : f32
      %36 = vector.broadcast %cst_20 : f32 to vector<8x16xf32>
      %c0_21 = arith.constant 0 : index
      %c0_22 = arith.constant 0 : index
      %37 = vector.load %arg4[%c0_21, %c0_22] : memref<8x16xf32, #tpu.memory_space<vmem>>, vector<8x16xf32>
      tpu.vector_store %arg4[%c0_21, %c0_22], %36 {strides = array<i32>} : memref<8x16xf32, #tpu.memory_space<vmem>>, vector<8x16xf32>,
      %cst_23 = arith.constant 0.000000e+00 : f32
      %38 = vector.broadcast %cst_23 : f32 to vector<8x16xf32>
      %c0_24 = arith.constant 0 : index
      %c0_25 = arith.constant 0 : index
      %39 = vector.load %arg5[%c0_24, %c0_25] : memref<8x16xf32, #tpu.memory_space<vmem>>, vector<8x16xf32>
      tpu.vector_store %arg5[%c0_24, %c0_25], %38 {strides = array<i32>} : memref<8x16xf32, #tpu.memory_space<vmem>>, vector<8x16xf32>,
    } else {
    }
    %c0 = arith.constant 0 : index
    %c0_1 = arith.constant 0 : index
    %3 = vector.load %arg1[%c0, %c0_1] : memref<32x16xf32, #tpu.memory_space<vmem>>, vector<32x16xf32>
    %cst = arith.constant 0.000000e+00 : f32
    %4 = vector.broadcast %cst : f32 to vector<32x16xf32>
    %5 = arith.subf %4, %3 : vector<32x16xf32>
    %cst_2 = arith.constant 0.000000e+00 : f32
    %6 = vector.broadcast %cst_2 : f32 to vector<32x16xf32>
    %7 = arith.maximumf %5, %6 : vector<32x16xf32>
    %8 = math.absf %5 : vector<32x16xf32>
    %cst_3 = arith.constant 0.000000e+00 : f32
    %9 = vector.broadcast %cst_3 : f32 to vector<32x16xf32>
    %10 = arith.subf %9, %8 : vector<32x16xf32>
    %11 = math.exp %10 : vector<32x16xf32>
    %12 = math.log1p %11 : vector<32x16xf32>
    %13 = arith.addf %7, %12 : vector<32x16xf32>
    %c0_4 = arith.constant 0 : index
    %c0_5 = arith.constant 0 : index
    %14 = vector.load %arg4[%c0_4, %c0_5] : memref<8x16xf32, #tpu.memory_space<vmem>>, vector<8x16xf32>
    %15 = vector.shape_cast %13 : vector<32x16xf32> to vector<4x8x16xf32>
    %cst_6 = arith.constant dense<0.000000e+00> : vector<8x16xf32>
    %16 = vector.multi_reduction <add>, %15, %cst_6 [0] : vector<4x8x16xf32> to vector<8x16xf32>
    %17 = arith.addf %14, %16 : vector<8x16xf32>
    %c0_7 = arith.constant 0 : index
    %c0_8 = arith.constant 0 : index
    %18 = vector.load %arg4[%c0_7, %c0_8] : memref<8x16xf32, #tpu.memory_space<vmem>>, vector<8x16xf32>
    tpu.vector_store %arg4[%c0_7, %c0_8], %17 {strides = array<i32>} : memref<8x16xf32, #tpu.memory_space<vmem>>, vector<8x16xf32>,
    %c0_9 = arith.constant 0 : index
    %c0_10 = arith.constant 0 : index
    %19 = vector.load %arg2[%c0_9, %c0_10] : memref<32x16xf32, #tpu.memory_space<vmem>>, vector<32x16xf32>
    %cst_11 = arith.constant 0.000000e+00 : f32
    %20 = vector.broadcast %cst_11 : f32 to vector<32x16xf32>
    %21 = arith.maximumf %19, %20 : vector<32x16xf32>
    %22 = math.absf %19 : vector<32x16xf32>
    %cst_12 = arith.constant 0.000000e+00 : f32
    %23 = vector.broadcast %cst_12 : f32 to vector<32x16xf32>
    %24 = arith.subf %23, %22 : vector<32x16xf32>
    %25 = math.exp %24 : vector<32x16xf32>
    %26 = math.log1p %25 : vector<32x16xf32>
    %27 = arith.addf %21, %26 : vector<32x16xf32>
    %c0_13 = arith.constant 0 : index
    %c0_14 = arith.constant 0 : index
    %28 = vector.load %arg5[%c0_13, %c0_14] : memref<8x16xf32, #tpu.memory_space<vmem>>, vector<8x16xf32>
    %29 = vector.shape_cast %27 : vector<32x16xf32> to vector<4x8x16xf32>
    %cst_15 = arith.constant dense<0.000000e+00> : vector<8x16xf32>
    %30 = vector.multi_reduction <add>, %29, %cst_15 [0] : vector<4x8x16xf32> to vector<8x16xf32>
    %31 = arith.addf %28, %30 : vector<8x16xf32>
    %c0_16 = arith.constant 0 : index
    %c0_17 = arith.constant 0 : index
    %32 = vector.load %arg5[%c0_16, %c0_17] : memref<8x16xf32, #tpu.memory_space<vmem>>, vector<8x16xf32>
    tpu.vector_store %arg5[%c0_16, %c0_17], %31 {strides = array<i32>} : memref<8x16xf32, #tpu.memory_space<vmem>>, vector<8x16xf32>,
    %c0_i32_18 = arith.constant 0 : i32
    %33 = arith.cmpi eq, %arg0, %c0_i32_18 : i32
    %34 = arith.extui %33 : i1 to i32
    %c0_i32_19 = arith.constant 0 : i32
    %35 = arith.cmpi ne, %34, %c0_i32_19 : i32
    scf.if %35 {
      %c0_20 = arith.constant 0 : index
      %c0_21 = arith.constant 0 : index
      %36 = vector.load %arg4[%c0_20, %c0_21] : memref<8x16xf32, #tpu.memory_space<vmem>>, vector<8x16xf32>
      %37 = vector.shape_cast %36 : vector<8x16xf32> to vector<1x8x16xf32>
      %cst_22 = arith.constant dense<0.000000e+00> : vector<1xf32>
      %38 = vector.multi_reduction <add>, %37, %cst_22 [1, 2] : vector<1x8x16xf32> to vector<1xf32>
      %39 = vector.shape_cast %38 : vector<1xf32> to vector<1x1x1xf32>
      %40 = vector.extract %39[0, 0, 0] : f32 from vector<1x1x1xf32>
      %cst_23 = arith.constant 0.001953125 : f32
      %41 = arith.mulf %40, %cst_23 : f32
      %c0_24 = arith.constant 0 : index
      %c0_25 = arith.constant 0 : index
      %42 = vector.load %arg5[%c0_24, %c0_25] : memref<8x16xf32, #tpu.memory_space<vmem>>, vector<8x16xf32>
      %43 = vector.shape_cast %42 : vector<8x16xf32> to vector<1x8x16xf32>
      %cst_26 = arith.constant dense<0.000000e+00> : vector<1xf32>
      %44 = vector.multi_reduction <add>, %43, %cst_26 [1, 2] : vector<1x8x16xf32> to vector<1xf32>
      %45 = vector.shape_cast %44 : vector<1xf32> to vector<1x1x1xf32>
      %46 = vector.extract %45[0, 0, 0] : f32 from vector<1x1x1xf32>
      %cst_27 = arith.constant 0.001953125 : f32
      %47 = arith.mulf %46, %cst_27 : f32
      %48 = arith.addf %41, %47 : f32
      %49 = vector.broadcast %48 : f32 to vector<8x128xf32>
      %c0_28 = arith.constant 0 : index
      %c0_29 = arith.constant 0 : index
      %50 = vector.load %arg3[%c0_28, %c0_29] : memref<8x128xf32, #tpu.memory_space<vmem>>, vector<8x128xf32>
      tpu.vector_store %arg3[%c0_28, %c0_29], %49 {strides = array<i32>} : memref<8x128xf32, #tpu.memory_space<vmem>>, vector<8x128xf32>,
    } else {
    }
    return
  }
  func.func @transform_0(%arg0: i32) -> (i32, i32) {
    %c0_i32 = arith.constant 0 : i32
    %c0_i32_0 = arith.constant 0 : i32
    return %arg0, %c0_i32 : i32, i32
  }
  func.func @transform_1(%arg0: i32) -> (i32, i32) {
    %c0_i32 = arith.constant 0 : i32
    %c0_i32_0 = arith.constant 0 : i32
    return %arg0, %c0_i32 : i32, i32
  }
  func.func @transform_2(%arg0: i32) -> (i32, i32) {
    %c0_i32 = arith.constant 0 : i32
    %c0_i32_0 = arith.constant 0 : i32
    %c0_i32_1 = arith.constant 0 : i32
    return %c0_i32, %c0_i32_0 : i32, i32
  }
}

</mosaic_0001>

<llo_original>
// kernel: tpu_custom_call.1
$region0: #{tpu_custom_call.1}
  #allocation0 [shape = 'u32[]', space=smem, size = 0x4, offset = 0x4, fixed_abs, tag = 'smem constant byte address 0x4 - core index']
  #allocation1 [shape = 'u32[144,128]{1,0:T(1,128)}', space=vmem, size = 0x12000, scoped, tag = 'internal scratch']
  #allocation2 [shape = 'f32[8,16]{1,0:T(8,128)}', space=vmem, size = 0x1000, scoped, tag = 'scratch operand']
  #allocation3 [shape = 'f32[8,16]{1,0:T(8,128)}', space=vmem, size = 0x1000, scoped, tag = 'scratch operand']
  %s0 = inlined_call_operand.vmem [shape: f32[32,16], index: 0, kind: input, shape index: {}]
  %s1 = inlined_call_operand.vmem [shape: f32[32,16], index: 1, kind: input, shape index: {}]
  %s2 = inlined_call_operand.hbm [shape: f32[8,128], index: 2, kind: output, shape index: {}]
  %s3 = sld [smem:[#allocation0]]
  $region26: #{tpu_custom_call.1} parent=0
    _
  %s5 = ssub.s32 1, %s3
  %s6 = scalar_select 0, %s5, %s3
  $region1: #{tpu_custom_call.1} parent=0
    #allocation4 [shape = 'u8[4096]{0}', space=vmem, size = 0x1000, scoped, tag = 'output window, operand 0, single buffered']
    #allocation5 [shape = 's32[1]{0}', space=sflag, size = 0x4, scoped, tag = 'scoped memory for tpu_custom_call.1']
    %7 = vsyncpa [#allocation5], 0
    // Predicated region
    $region2: #{tpu_custom_call.1} parent=1 // pred_check
      _
    $region3: #{tpu_custom_call.1} parent=1 // pred_check_branch
      %9 = sbr.rel (0) target = $region5
    $region4: #{tpu_custom_call.1} parent=1 // pred_region
      _
    $region5: #{tpu_custom_call.1} parent=1 // pred_fallthru
      _
    // Predicated region
    $region6: #{tpu_custom_call.1} parent=1 // pred_check
      _
    $region7: #{tpu_custom_call.1} parent=1 // pred_check_branch
      %11 = sbr.rel (0) target = $region9
    $region8: #{tpu_custom_call.1} parent=1 // pred_region
      _
    $region9: #{tpu_custom_call.1} parent=1 // pred_fallthru
      _
    %p12 = scmp.eq.s32.totalorder 0, 0
    // Predicated region
    $region10: #{tpu_custom_call.1} parent=1 // pred_check
      %p13 = pneg %p12
    $region11: #{tpu_custom_call.1} parent=1 // pred_check_branch
      %15 = sbr.rel (%p13) target = $region13
    $region12: #{tpu_custom_call.1} parent=1 // pred_region
      %vm16 = vcmask 130048
      %17 = vst.msk [vmem:[#allocation2] sm:$0xff] %vm16, 0.0
      %18 = vst.msk [vmem:[#allocation3] sm:$0xff] %vm16, 0.0
    $region13: #{tpu_custom_call.1} parent=1 // pred_fallthru
      _
    %v19 = vld [vmem:[%s0] sm:$0xff]
    %v20 = vld [vmem:[%s0 + $0x8] sm:$0xff]
    %v21 = vld [vmem:[%s0 + $0x10] sm:$0xff]
    %v22 = vld [vmem:[%s0 + $0x18] sm:$0xff]
    %v23 = vsub.f32 0.0, %v19
    %v24 = vsub.f32 0.0, %v20
    %v25 = vsub.f32 0.0, %v21
    %v26 = vsub.f32 0.0, %v22
    %v27 = vmax.f32 %v23, 0.0
    %v28 = vmax.f32 %v24, 0.0
    %v29 = vmax.f32 %v25, 0.0
    %v30 = vmax.f32 %v26, 0.0
    %v31 = vand.u32 2147483647, %v23
    %v32 = vand.u32 2147483647, %v24
    %v33 = vand.u32 2147483647, %v25
    %v34 = vand.u32 2147483647, %v26
    %v35 = vsub.f32 0.0, %v31
    %v36 = vsub.f32 0.0, %v32
    %v37 = vsub.f32 0.0, %v33
    %v38 = vsub.f32 0.0, %v34
    %v39 = vmul.f32 %v35, 1.442695
    %v40 = vpow.pop %v39
    %v41 = vmul.f32 %v36, 1.442695
    %v42 = vpow.pop %v41
    %v43 = vmul.f32 %v37, 1.442695
    %v44 = vpow.pop %v43
    %v45 = vmul.f32 %v38, 1.442695
    %v46 = vpow.pop %v45
    %v47 = vadd.f32 %v40, 1.0
    %v48 = vlog2.pop %v47
    %v49 = vmul.f32 %v48, 0.6931472
    %v50 = vmul.f32 -0.5, %v40
    %v51 = vadd.f32 %v50, 1.0
    %v52 = vmul.f32 %v51, %v40
    %v53 = vand.u32 2147483647, %v40
    %vm54 = vcmp.lt.f32.partialorder %v53, 0.0004427343
    %v55 = vsel %vm54, %v52, %v49
    %v56 = vadd.f32 %v42, 1.0
    %v57 = vlog2.pop %v56
    %v58 = vmul.f32 %v57, 0.6931472
    %v59 = vmul.f32 -0.5, %v42
    %v60 = vadd.f32 %v59, 1.0
    %v61 = vmul.f32 %v60, %v42
    %v62 = vand.u32 2147483647, %v42
    %vm63 = vcmp.lt.f32.partialorder %v62, 0.0004427343
    %v64 = vsel %vm63, %v61, %v58
    %v65 = vadd.f32 %v44, 1.0
    %v66 = vlog2.pop %v65
    %v67 = vmul.f32 %v66, 0.6931472
    %v68 = vmul.f32 -0.5, %v44
    %v69 = vadd.f32 %v68, 1.0
    %v70 = vmul.f32 %v69, %v44
    %v71 = vand.u32 2147483647, %v44
    %vm72 = vcmp.lt.f32.partialorder %v71, 0.0004427343
    %v73 = vsel %vm72, %v70, %v67
    %v74 = vadd.f32 %v46, 1.0
    %v75 = vlog2.pop %v74
    %v76 = vmul.f32 %v75, 0.6931472
    %v77 = vmul.f32 -0.5, %v46
    %v78 = vadd.f32 %v77, 1.0
    %v79 = vmul.f32 %v78, %v46
    %v80 = vand.u32 2147483647, %v46
    %vm81 = vcmp.lt.f32.partialorder %v80, 0.0004427343
    %v82 = vsel %vm81, %v79, %v76
    %v83 = vadd.f32 %v27, %v55
    %v84 = vadd.f32 %v28, %v64
    %v85 = vadd.f32 %v29, %v73
    %v86 = vadd.f32 %v30, %v82
    %v87 = vld [vmem:[#allocation2] sm:$0xff]
    %vm88 = vcmask 130048
    %v89 = vsel %vm88, %v83, 0.0
    %v90 = vsel %vm88, %v84, 0.0
    %v91 = vadd.f32 %v89, %v90
    %v92 = vsel %vm88, %v85, 0.0
    %v93 = vadd.f32 %v91, %v92
    %v94 = vsel %vm88, %v86, 0.0
    %v95 = vadd.f32 %v93, %v94
    %v96 = vadd.f32 %v87, %v95
    %97 = vst.msk [vmem:[#allocation2] sm:$0xff] %vm88, %v96
    %v98 = vld [vmem:[%s1] sm:$0xff]
    %v99 = vld [vmem:[%s1 + $0x8] sm:$0xff]
    %v100 = vld [vmem:[%s1 + $0x10] sm:$0xff]
    %v101 = vld [vmem:[%s1 + $0x18] sm:$0xff]
    %v102 = vmax.f32 %v98, 0.0
    %v103 = vmax.f32 %v99, 0.0
    %v104 = vmax.f32 %v100, 0.0
    %v105 = vmax.f32 %v101, 0.0
    %v106 = vand.u32 2147483647, %v98
    %v107 = vand.u32 2147483647, %v99
    %v108 = vand.u32 2147483647, %v100
    %v109 = vand.u32 2147483647, %v101
    %v110 = vsub.f32 0.0, %v106
    %v111 = vsub.f32 0.0, %v107
    %v112 = vsub.f32 0.0, %v108
    %v113 = vsub.f32 0.0, %v109
    %v114 = vmul.f32 %v110, 1.442695
    %v115 = vpow.pop %v114
    %v116 = vmul.f32 %v111, 1.442695
    %v117 = vpow.pop %v116
    %v118 = vmul.f32 %v112, 1.442695
    %v119 = vpow.pop %v118
    %v120 = vmul.f32 %v113, 1.442695
    %v121 = vpow.pop %v120
    %v122 = vadd.f32 %v115, 1.0
    %v123 = vlog2.pop %v122
    %v124 = vmul.f32 %v123, 0.6931472
    %v125 = vmul.f32 -0.5, %v115
    %v126 = vadd.f32 %v125, 1.0
    %v127 = vmul.f32 %v126, %v115
    %v128 = vand.u32 2147483647, %v115
    %vm129 = vcmp.lt.f32.partialorder %v128, 0.0004427343
    %v130 = vsel %vm129, %v127, %v124
    %v131 = vadd.f32 %v117, 1.0
    %v132 = vlog2.pop %v131
    %v133 = vmul.f32 %v132, 0.6931472
    %v134 = vmul.f32 -0.5, %v117
    %v135 = vadd.f32 %v134, 1.0
    %v136 = vmul.f32 %v135, %v117
    %v137 = vand.u32 2147483647, %v117
    %vm138 = vcmp.lt.f32.partialorder %v137, 0.0004427343
    %v139 = vsel %vm138, %v136, %v133
    %v140 = vadd.f32 %v119, 1.0
    %v141 = vlog2.pop %v140
    %v142 = vmul.f32 %v141, 0.6931472
    %v143 = vmul.f32 -0.5, %v119
    %v144 = vadd.f32 %v143, 1.0
    %v145 = vmul.f32 %v144, %v119
    %v146 = vand.u32 2147483647, %v119
    %vm147 = vcmp.lt.f32.partialorder %v146, 0.0004427343
    %v148 = vsel %vm147, %v145, %v142
    %v149 = vadd.f32 %v121, 1.0
    %v150 = vlog2.pop %v149
    %v151 = vmul.f32 %v150, 0.6931472
    %v152 = vmul.f32 -0.5, %v121
    %v153 = vadd.f32 %v152, 1.0
    %v154 = vmul.f32 %v153, %v121
    %v155 = vand.u32 2147483647, %v121
    %vm156 = vcmp.lt.f32.partialorder %v155, 0.0004427343
    %v157 = vsel %vm156, %v154, %v151
    %v158 = vadd.f32 %v102, %v130
    %v159 = vadd.f32 %v103, %v139
    %v160 = vadd.f32 %v104, %v148
    %v161 = vadd.f32 %v105, %v157
    %v162 = vld [vmem:[#allocation3] sm:$0xff]
    %v163 = vsel %vm88, %v158, 0.0
    %v164 = vsel %vm88, %v159, 0.0
    %v165 = vadd.f32 %v163, %v164
    %v166 = vsel %vm88, %v160, 0.0
    %v167 = vadd.f32 %v165, %v166
    %v168 = vsel %vm88, %v161, 0.0
    %v169 = vadd.f32 %v167, %v168
    %v170 = vadd.f32 %v162, %v169
    %171 = vst.msk [vmem:[#allocation3] sm:$0xff] %vm88, %v170
    // Predicated region
    $region14: #{tpu_custom_call.1} parent=1 // pred_check
      %p172 = pneg %p12
    $region15: #{tpu_custom_call.1} parent=1 // pred_check_branch
      %174 = sbr.rel (%p172) target = $region17
    $region16: #{tpu_custom_call.1} parent=1 // pred_region
      %v175 = vld [vmem:[#allocation2] sm:$0xff]
      %v176 = vsel %vm88, %v175, 0.0
      %177 = vadd.xlane.f32.xlu0 %v176
      %v178 = vpop.xlane.xlu0 %177
      %v179 = vrot.slane %v178, 4
      %v180 = vadd.f32 %v178, %v179
      %v181 = vrot.slane %v180, 2
      %v182 = vadd.f32 %v180, %v181
      %v183 = vrot.slane %v182, 1
      %v184 = vadd.f32 %v182, %v183
      %s185 = vtos %v184
      %s186 = smul.f32 %s185, 0.001953125
      %v187 = vld [vmem:[#allocation3] sm:$0xff]
      %v188 = vsel %vm88, %v187, 0.0
      %189 = vadd.xlane.f32.xlu0 %v188
      %v190 = vpop.xlane.xlu0 %189
      %v191 = vrot.slane %v190, 4
      %v192 = vadd.f32 %v190, %v191
      %v193 = vrot.slane %v192, 2
      %v194 = vadd.f32 %v192, %v193
      %v195 = vrot.slane %v194, 1
      %v196 = vadd.f32 %v194, %v195
      %s197 = vtos %v196
      %s198 = smul.f32 %s197, 0.001953125
      %s199 = sadd.f32 %s186, %s198
      %v200 = vstv %s199
      %201 = vst [vmem:[#allocation4] sm:$0xff] %v200
    $region17: #{tpu_custom_call.1} parent=1 // pred_fallthru
      _
    // Predicated region
    $region18: #{tpu_custom_call.1} parent=1 // pred_check
      _
    $region19: #{tpu_custom_call.1} parent=1 // pred_check_branch
      %203 = sbr.rel (0) target = $region21
    $region20: #{tpu_custom_call.1} parent=1 // pred_region
      %s205 = ssub.s32 128, 128
      %206 = vsyncadd [#allocation5], %s205
      %s208 = sshll.u32 [#allocation4], 4
      %s209 = int_to_ptr.vmem [resolvable:$true] %s208
      %211 = dma.vmem_to_hbm [thread:$0]  %s209, 128, %s2, [#allocation5]
    $region21: #{tpu_custom_call.1} parent=1 // pred_fallthru
      _
    // Predicated region
    $region22: #{tpu_custom_call.1} parent=1 // pred_check
      _
    $region23: #{tpu_custom_call.1} parent=1 // pred_check_branch
      %213 = sbr.rel (0) target = $region25
    $region24: #{tpu_custom_call.1} parent=1 // pred_region
      %214 = dma.done [#allocation5], 128
    $region25: #{tpu_custom_call.1} parent=1 // pred_fallthru
      _
    %215 = vsyncpa [#allocation5], 1

</llo_original>
